<compile_context>
chip_gen: v7x
topology: tpu7x:2x2x1
jax: 0.10.0
libtpu: 0.0.40
codegen_flags: <defaults>
</compile_context>

<pallas_src>
import jax
import jax.numpy as jnp
from jax.experimental import pallas as pl
from jax.experimental.pallas import tpu as pltpu

hidden_channels = 128
input_channels = 4
batch = 2


def linear_kernel(z_ref, w_ref, b_ref, o_ref):
    # z_ref: (M, K)            f32 VMEM
    # w_ref: (K, out_feats)    f32 VMEM (pre-transposed once at init — NOT per call)
    # b_ref: (1, out_feats)    f32 VMEM
    # o_ref: (M, out_feats)    lane-dense last dim (512 = 4x128) → unmasked stores
    acc = jnp.dot(z_ref[...], w_ref[...], preferred_element_type=jnp.float32)
    o_ref[...] = (acc + b_ref[...]).astype(o_ref.dtype)


def _linear_call(z2d, weight_t, bias2d):
    """One grid-less pallas_call: (M,K)x(K,N)+b with everything resident in VMEM."""
    M = z2d.shape[0]
    out_feats = weight_t.shape[1]
    vmem = pl.BlockSpec(memory_space=pltpu.MemorySpace.VMEM)
    return pl.pallas_call(
        linear_kernel,
        out_shape=jax.ShapeDtypeStruct((M, out_feats), z2d.dtype),
        in_specs=[vmem, vmem, vmem],
        out_specs=vmem,
    )(z2d, weight_t, bias2d)


def f_forward(t, z, weight_t, bias2d):
    """Pallas implementation of F.forward: linear(z).view(batch, hidden, in_ch).

    weight_t: (in_features, out_features) — transposed once at init.
    bias2d:   (1, out_features)
    """
    del t  # unused by the reference module's forward
    B = z.shape[0]
    out = _linear_call(z, weight_t, bias2d)
    # Row-major reshape glue (the .view in the PyTorch module) — free in JAX.
    return out.reshape(B, hidden_channels, input_channels)


def f_forward_fused(ts, zs, weight_t, bias2d):
    """Fused variant: T independent timesteps batched along M in ONE kernel launch.

    zs: (T, B, in_features). Returns (T, B, hidden, in_ch).
    The weight is DMA'd into VMEM once for all T steps (vs. once per step if
    f_forward were called in a Python loop).
    """
    del ts  # forward ignores t
    T, B, H = zs.shape
    out = _linear_call(zs.reshape(T * B, H), weight_t, bias2d)
    return out.reshape(T, B, hidden_channels, input_channels)


if __name__ == "__main__":
    key = jax.random.PRNGKey(0)
    k_w, k_b, k_z, k_zs = jax.random.split(key, 4)

    out_feats = hidden_channels * input_channels
    # Deterministic parameter init in PyTorch Linear layout (out_features, in_features).
    bound = 1.0 / (hidden_channels ** 0.5)
    weight = jax.random.uniform(
        k_w, (out_feats, hidden_channels), jnp.float32, -bound, bound)
    bias = jax.random.uniform(k_b, (out_feats,), jnp.float32, -bound, bound)

    # One-time parameter preparation (init-time, NOT per call):
    #  - transpose weight to (in_features, out_features) so the kernel runs a plain
    #    (M,K)x(K,N) dot with no in-kernel transpose,
    #  - reshape bias to 2D for a clean VMEM layout / lane broadcast.
    weight_t = jnp.asarray(weight.T)
    bias2d = bias.reshape(1, out_feats)

    # --- single-call path (exact F.forward(t, z) semantics) ---
    z = jax.random.normal(k_z, (batch, hidden_channels), jnp.float32)
    t = jnp.float32(0.0)  # unused, kept for signature parity with F.forward(t, z)

    result = f_forward(t, z, weight_t, bias2d)
    result = jax.block_until_ready(result)

    ref = (z @ weight.T + bias).reshape(batch, hidden_channels, input_channels)
    assert result.shape == (batch, hidden_channels, input_channels)
    assert jnp.allclose(result, ref, atol=1e-5, rtol=1e-5)

    # --- fused multi-timestep path (T*B = 8 rows -> f32 sublane-tile aligned) ---
    T = 4
    zs = jax.random.normal(k_zs, (T, batch, hidden_channels), jnp.float32)
    ts = jnp.linspace(0.0, 1.0, T, dtype=jnp.float32)

    fused = f_forward_fused(ts, zs, weight_t, bias2d)
    fused = jax.block_until_ready(fused)

    ref_fused = (zs.reshape(T * batch, hidden_channels) @ weight.T + bias).reshape(
        T, batch, hidden_channels, input_channels)
    assert fused.shape == (T, batch, hidden_channels, input_channels)
    assert jnp.allclose(fused, ref_fused, atol=1e-5, rtol=1e-5)

    print("KERNEL_OK")
</pallas_src>

<mosaic_0001>
module attributes {stable_mosaic.version = 11 : i64} {
  func.func @linear_kernel(%arg0: memref<2x128xf32, #tpu.memory_space<vmem>>, %arg1: memref<128x512xf32, #tpu.memory_space<vmem>>, %arg2: memref<1x512xf32, #tpu.memory_space<vmem>>, %arg3: memref<2x512xf32, #tpu.memory_space<vmem>>) attributes {dimension_semantics = [], scalar_prefetch = 0 : i64, scratch_operands = 0 : i64, tpu.core_type = #tpu.core_type<tc>} {
    %c0 = arith.constant 0 : index
    %c0_0 = arith.constant 0 : index
    %0 = vector.load %arg0[%c0, %c0_0] : memref<2x128xf32, #tpu.memory_space<vmem>>, vector<2x128xf32>
    %c0_1 = arith.constant 0 : index
    %c0_2 = arith.constant 0 : index
    %1 = vector.load %arg1[%c0_1, %c0_2] : memref<128x512xf32, #tpu.memory_space<vmem>>, vector<128x512xf32>
    %cst = arith.constant dense<0.000000e+00> : vector<2x512xf32>
    %2 = tpu.matmul %0, %1, %cst {dimension_numbers = #tpu.dot_dimension_numbers<[1], [0], [0], [1], [0, 0, 1, 1], [], []>} : vector<2x128xf32>, vector<128x512xf32>, vector<2x512xf32> -> vector<2x512xf32>
    %c0_3 = arith.constant 0 : index
    %c0_4 = arith.constant 0 : index
    %3 = vector.load %arg2[%c0_3, %c0_4] : memref<1x512xf32, #tpu.memory_space<vmem>>, vector<1x512xf32>
    %4 = vector.broadcast %3 : vector<1x512xf32> to vector<2x512xf32>
    %5 = arith.addf %2, %4 : vector<2x512xf32>
    %c0_5 = arith.constant 0 : index
    %c0_6 = arith.constant 0 : index
    %6 = vector.load %arg3[%c0_5, %c0_6] : memref<2x512xf32, #tpu.memory_space<vmem>>, vector<2x512xf32>
    tpu.vector_store %arg3[%c0_5, %c0_6], %5 {strides = array<i32>} : memref<2x512xf32, #tpu.memory_space<vmem>>, vector<2x512xf32>,
    return
  }
}

</mosaic_0001>

<llo_original>
// kernel: tpu_custom_call.1
$region0: #{tpu_custom_call.1}
  #allocation0 [shape = 'u32[]', space=smem, size = 0x4, offset = 0x4, fixed_abs, tag = 'smem constant byte address 0x4 - core index']
  #allocation1 [shape = 'u32[144,128]{1,0:T(1,128)}', space=vmem, size = 0x12000, scoped, tag = 'internal scratch']
  %s0 = inlined_call_operand.hbm [shape: f32[2,128], index: 0, kind: input, shape index: {}]
  %s1 = inlined_call_operand.hbm [shape: f32[128,512], index: 1, kind: input, shape index: {}]
  %s2 = inlined_call_operand.vmem [shape: f32[1,512], index: 2, kind: input, shape index: {}]
  %s3 = inlined_call_operand.hbm [shape: f32[2,512], index: 3, kind: output, shape index: {}]
  %s4 = sld [smem:[#allocation0]]
  $region30: #{tpu_custom_call.1} parent=0
    _
  %s6 = ssub.s32 1, %s4
  %s7 = scalar_select 0, %s6, %s4
  $region1: #{tpu_custom_call.1} parent=0
    #allocation2 [shape = 'u8[1024]{0}', space=vmem, size = 0x400, scoped, tag = 'input window, operand 0, single buffered']
    #allocation3 [shape = 's32[1]{0}', space=sflag, size = 0x4, scoped, tag = 'scoped memory for tpu_custom_call.1']
    #allocation4 [shape = 's32[1]{0}', space=sflag, size = 0x4, scoped, tag = 'scoped memory for tpu_custom_call.1']
    #allocation5 [shape = 'u8[262144]{0}', space=vmem, size = 0x40000, scoped, tag = 'input window, operand 1, single buffered']
    #allocation6 [shape = 's32[1]{0}', space=sflag, size = 0x4, scoped, tag = 'scoped memory for tpu_custom_call.1']
    #allocation7 [shape = 'u8[4096]{0}', space=vmem, size = 0x1000, scoped, tag = 'output window, operand 0, single buffered']
    %8 = vsyncpa [#allocation3], 0
    %9 = vsyncpa [#allocation6], 0
    %10 = vsyncpa [#allocation4], 0
    // Predicated region
    $region2: #{tpu_custom_call.1} parent=1 // pred_check
      _
    $region3: #{tpu_custom_call.1} parent=1 // pred_check_branch
      %12 = sbr.rel (0) target = $region5
    $region4: #{tpu_custom_call.1} parent=1 // pred_region
      %s14 = ssub.s32 32, 32
      %15 = vsyncadd [#allocation3], %s14
      %s17 = sshll.u32 [#allocation2], 4
      %s18 = int_to_ptr.vmem [resolvable:$true] %s17
      %20 = dma.hbm_to_vmem [thread:$0]  %s0, 32, %s18, [#allocation3]
    $region5: #{tpu_custom_call.1} parent=1 // pred_fallthru
      _
    // Predicated region
    $region6: #{tpu_custom_call.1} parent=1 // pred_check
      _
    $region7: #{tpu_custom_call.1} parent=1 // pred_check_branch
      %22 = sbr.rel (0) target = $region9
    $region8: #{tpu_custom_call.1} parent=1 // pred_region
      %s24 = ssub.s32 8192, 8192
      %25 = vsyncadd [#allocation6], %s24
      %s26 = sshll.u32 [#allocation5], 4
      %s27 = int_to_ptr.vmem [resolvable:$true] %s26
      %32 = dma.hbm_to_vmem [thread:$0]  %s1, 8192, %s27, [#allocation6], 512, 512, 32
    $region9: #{tpu_custom_call.1} parent=1 // pred_fallthru
      _
    // Predicated region
    $region10: #{tpu_custom_call.1} parent=1 // pred_check
      _
    $region11: #{tpu_custom_call.1} parent=1 // pred_check_branch
      %34 = sbr.rel (0) target = $region13
    $region12: #{tpu_custom_call.1} parent=1 // pred_region
      _
    $region13: #{tpu_custom_call.1} parent=1 // pred_fallthru
      _
    // Predicated region
    $region14: #{tpu_custom_call.1} parent=1 // pred_check
      _
    $region15: #{tpu_custom_call.1} parent=1 // pred_check_branch
      %36 = sbr.rel (0) target = $region17
    $region16: #{tpu_custom_call.1} parent=1 // pred_region
      %37 = dma.done [#allocation3], 32
    $region17: #{tpu_custom_call.1} parent=1 // pred_fallthru
      _
    // Predicated region
    $region18: #{tpu_custom_call.1} parent=1 // pred_check
      _
    $region19: #{tpu_custom_call.1} parent=1 // pred_check_branch
      %39 = sbr.rel (0) target = $region21
    $region20: #{tpu_custom_call.1} parent=1 // pred_region
      %40 = dma.done [#allocation6], 8192
    $region21: #{tpu_custom_call.1} parent=1 // pred_fallthru
      _
    %v41 = vld [vmem:[#allocation2] sm:$0x3]
    %v42 = vld [vmem:[#allocation5] sm:$0xff]
    %v43 = vld [vmem:[#allocation5 + $0x8] sm:$0xff]
    %v44 = vld [vmem:[#allocation5 + $0x10] sm:$0xff]
    %v45 = vld [vmem:[#allocation5 + $0x18] sm:$0xff]
    %v46 = vld [vmem:[#allocation5 + $0x20] sm:$0xff]
    %v47 = vld [vmem:[#allocation5 + $0x28] sm:$0xff]
    %v48 = vld [vmem:[#allocation5 + $0x30] sm:$0xff]
    %v49 = vld [vmem:[#allocation5 + $0x38] sm:$0xff]
    %v50 = vld [vmem:[#allocation5 + $0x40] sm:$0xff]
    %v51 = vld [vmem:[#allocation5 + $0x48] sm:$0xff]
    %v52 = vld [vmem:[#allocation5 + $0x50] sm:$0xff]
    %v53 = vld [vmem:[#allocation5 + $0x58] sm:$0xff]
    %v54 = vld [vmem:[#allocation5 + $0x60] sm:$0xff]
    %v55 = vld [vmem:[#allocation5 + $0x68] sm:$0xff]
    %v56 = vld [vmem:[#allocation5 + $0x70] sm:$0xff]
    %v57 = vld [vmem:[#allocation5 + $0x78] sm:$0xff]
    %v58 = vld [vmem:[#allocation5 + $0x80] sm:$0xff]
    %v59 = vld [vmem:[#allocation5 + $0x88] sm:$0xff]
    %v60 = vld [vmem:[#allocation5 + $0x90] sm:$0xff]
    %v61 = vld [vmem:[#allocation5 + $0x98] sm:$0xff]
    %v62 = vld [vmem:[#allocation5 + $0xa0] sm:$0xff]
    %v63 = vld [vmem:[#allocation5 + $0xa8] sm:$0xff]
    %v64 = vld [vmem:[#allocation5 + $0xb0] sm:$0xff]
    %v65 = vld [vmem:[#allocation5 + $0xb8] sm:$0xff]
    %v66 = vld [vmem:[#allocation5 + $0xc0] sm:$0xff]
    %v67 = vld [vmem:[#allocation5 + $0xc8] sm:$0xff]
    %v68 = vld [vmem:[#allocation5 + $0xd0] sm:$0xff]
    %v69 = vld [vmem:[#allocation5 + $0xd8] sm:$0xff]
    %v70 = vld [vmem:[#allocation5 + $0xe0] sm:$0xff]
    %v71 = vld [vmem:[#allocation5 + $0xe8] sm:$0xff]
    %v72 = vld [vmem:[#allocation5 + $0xf0] sm:$0xff]
    %v73 = vld [vmem:[#allocation5 + $0xf8] sm:$0xff]
    %v74 = vld [vmem:[#allocation5 + $0x100] sm:$0xff]
    %v75 = vld [vmem:[#allocation5 + $0x108] sm:$0xff]
    %v76 = vld [vmem:[#allocation5 + $0x110] sm:$0xff]
    %v77 = vld [vmem:[#allocation5 + $0x118] sm:$0xff]
    %v78 = vld [vmem:[#allocation5 + $0x120] sm:$0xff]
    %v79 = vld [vmem:[#allocation5 + $0x128] sm:$0xff]
    %v80 = vld [vmem:[#allocation5 + $0x130] sm:$0xff]
    %v81 = vld [vmem:[#allocation5 + $0x138] sm:$0xff]
    %v82 = vld [vmem:[#allocation5 + $0x140] sm:$0xff]
    %v83 = vld [vmem:[#allocation5 + $0x148] sm:$0xff]
    %v84 = vld [vmem:[#allocation5 + $0x150] sm:$0xff]
    %v85 = vld [vmem:[#allocation5 + $0x158] sm:$0xff]
    %v86 = vld [vmem:[#allocation5 + $0x160] sm:$0xff]
    %v87 = vld [vmem:[#allocation5 + $0x168] sm:$0xff]
    %v88 = vld [vmem:[#allocation5 + $0x170] sm:$0xff]
    %v89 = vld [vmem:[#allocation5 + $0x178] sm:$0xff]
    %v90 = vld [vmem:[#allocation5 + $0x180] sm:$0xff]
    %v91 = vld [vmem:[#allocation5 + $0x188] sm:$0xff]
    %v92 = vld [vmem:[#allocation5 + $0x190] sm:$0xff]
    %v93 = vld [vmem:[#allocation5 + $0x198] sm:$0xff]
    %v94 = vld [vmem:[#allocation5 + $0x1a0] sm:$0xff]
    %v95 = vld [vmem:[#allocation5 + $0x1a8] sm:$0xff]
    %v96 = vld [vmem:[#allocation5 + $0x1b0] sm:$0xff]
    %v97 = vld [vmem:[#allocation5 + $0x1b8] sm:$0xff]
    %v98 = vld [vmem:[#allocation5 + $0x1c0] sm:$0xff]
    %v99 = vld [vmem:[#allocation5 + $0x1c8] sm:$0xff]
    %v100 = vld [vmem:[#allocation5 + $0x1d0] sm:$0xff]
    %v101 = vld [vmem:[#allocation5 + $0x1d8] sm:$0xff]
    %v102 = vld [vmem:[#allocation5 + $0x1e0] sm:$0xff]
    %v103 = vld [vmem:[#allocation5 + $0x1e8] sm:$0xff]
    %v104 = vld [vmem:[#allocation5 + $0x1f0] sm:$0xff]
    %v105 = vld [vmem:[#allocation5 + $0x1f8] sm:$0xff]
    %v106 = vld [vmem:[%s2] sm:$0xf]
    %v108 = vlaneseq
    %v109 = vshrl.u32 %v108, 7
    %v110 = vsub.s32 0, %v109
    %v111 = vrot.slane %v106, %v110
    %v112 = vlaneseq
    %v113 = vshrl.u32 %v112, 7
    %v114 = vsub.s32 1, %v113
    %v115 = vrot.slane %v106, %v114
    %v116 = vlaneseq
    %v117 = vshrl.u32 %v116, 7
    %v118 = vsub.s32 2, %v117
    %v119 = vrot.slane %v106, %v118
    %v120 = vlaneseq
    %v121 = vshrl.u32 %v120, 7
    %v122 = vsub.s32 3, %v121
    %v123 = vrot.slane %v106, %v122
    %128 = vmatprep.subr.mxu0 %v43
    %129 = vmatpush1.msra.mxu0 %v42
    %130 = vmatprep.subr.mxu0 %v47
    %131 = vmatpush1.msra.mxu0 %v46
    %132 = vmatprep.subr.mxu0 %v51
    %133 = vmatpush1.msra.mxu0 %v50
    %134 = vmatprep.subr.mxu0 %v55
    %135 = vmatpush1.msra.mxu0 %v54
    %136 = vmatprep.subr.mxu0 %v59
    %137 = vmatpush1.msra.mxu0 %v58
    %138 = vmatprep.subr.mxu0 %v63
    %139 = vmatpush1.msra.mxu0 %v62
    %140 = vmatprep.subr.mxu0 %v67
    %141 = vmatpush1.msra.mxu0 %v66
    %142 = vmatprep.subr.mxu0 %v71
    %143 = vmatpush1.msra.mxu0 %v70
    %144 = vmatprep.subr.mxu0 %v75
    %145 = vmatpush1.msra.mxu0 %v74
    %146 = vmatprep.subr.mxu0 %v79
    %147 = vmatpush1.msra.mxu0 %v78
    %148 = vmatprep.subr.mxu0 %v83
    %149 = vmatpush1.msra.mxu0 %v82
    %150 = vmatprep.subr.mxu0 %v87
    %151 = vmatpush1.msra.mxu0 %v86
    %152 = vmatprep.subr.mxu0 %v91
    %153 = vmatpush1.msra.mxu0 %v90
    %154 = vmatprep.subr.mxu0 %v95
    %155 = vmatpush1.msra.mxu0 %v94
    %156 = vmatprep.subr.mxu0 %v99
    %157 = vmatpush1.msra.mxu0 %v98
    %158 = vmatprep.subr.mxu0 %v103
    %159 = vmatpush1.msra.mxu0 %v102
    %160 = vmatprep.subr.mxu0 0.0
    %161 = vmatpush1.msra.mxu0 0.0
    %162 = vmatprep.subr.mxu0 0.0
    %163 = vmatpush1.msra.mxu0 0.0
    %164 = vmatprep.subr.mxu0 0.0
    %165 = vmatpush1.msra.mxu0 0.0
    %166 = vmatprep.subr.mxu0 0.0
    %167 = vmatpush1.msra.mxu0 0.0
    %168 = vmatprep.subr.mxu0 0.0
    %169 = vmatpush1.msra.mxu0 0.0
    %170 = vmatprep.subr.mxu0 0.0
    %171 = vmatpush1.msra.mxu0 0.0
    %172 = vmatprep.subr.mxu0 0.0
    %173 = vmatpush1.msra.mxu0 0.0
    %174 = vmatprep.subr.mxu0 0.0
    %175 = vmatpush1.msra.mxu0 0.0
    %176 = vmatprep.subr.mxu0 0.0
    %177 = vmatpush1.msra.mxu0 0.0
    %178 = vmatprep.subr.mxu0 0.0
    %179 = vmatpush1.msra.mxu0 0.0
    %180 = vmatprep.subr.mxu0 0.0
    %181 = vmatpush1.msra.mxu0 0.0
    %182 = vmatprep.subr.mxu0 0.0
    %183 = vmatpush1.msra.mxu0 0.0
    %184 = vmatprep.subr.mxu0 0.0
    %185 = vmatpush1.msra.mxu0 0.0
    %186 = vmatprep.subr.mxu0 0.0
    %187 = vmatpush1.msra.mxu0 0.0
    %188 = vmatprep.subr.mxu0 0.0
    %189 = vmatpush1.msra.mxu0 0.0
    %190 = vmatprep.subr.mxu0 0.0
    %191 = vmatpush1.msra.mxu0 0.0
    %192 = vmatprep.mubr.f32.mxu0 0.0
    %193 = vmatmul.mubr.f32.gmra.mrb[0].mxu0 %v41
    %v194 = vpop.f32.mrb[0].mxu0
    %v195 = vadd.f32 %v111, %v194
    %v196 = vpop.f32.mrb[0].mxu0
    %v197 = vadd.f32 %v115, %v196
    %198 = vdwg.mxu0
    %199 = vmatprep.subr.mxu0 %v45
    %200 = vmatpush1.msra.mxu0 %v44
    %201 = vmatprep.subr.mxu0 %v49
    %202 = vmatpush1.msra.mxu0 %v48
    %203 = vmatprep.subr.mxu0 %v53
    %204 = vmatpush1.msra.mxu0 %v52
    %205 = vmatprep.subr.mxu0 %v57
    %206 = vmatpush1.msra.mxu0 %v56
    %207 = vmatprep.subr.mxu0 %v61
    %208 = vmatpush1.msra.mxu0 %v60
    %209 = vmatprep.subr.mxu0 %v65
    %210 = vmatpush1.msra.mxu0 %v64
    %211 = vmatprep.subr.mxu0 %v69
    %212 = vmatpush1.msra.mxu0 %v68
    %213 = vmatprep.subr.mxu0 %v73
    %214 = vmatpush1.msra.mxu0 %v72
    %215 = vmatprep.subr.mxu0 %v77
    %216 = vmatpush1.msra.mxu0 %v76
    %217 = vmatprep.subr.mxu0 %v81
    %218 = vmatpush1.msra.mxu0 %v80
    %219 = vmatprep.subr.mxu0 %v85
    %220 = vmatpush1.msra.mxu0 %v84
    %221 = vmatprep.subr.mxu0 %v89
    %222 = vmatpush1.msra.mxu0 %v88
    %223 = vmatprep.subr.mxu0 %v93
    %224 = vmatpush1.msra.mxu0 %v92
    %225 = vmatprep.subr.mxu0 %v97
    %226 = vmatpush1.msra.mxu0 %v96
    %227 = vmatprep.subr.mxu0 %v101
    %228 = vmatpush1.msra.mxu0 %v100
    %229 = vmatprep.subr.mxu0 %v105
    %230 = vmatpush1.msra.mxu0 %v104
    %231 = vmatprep.subr.mxu0 0.0
    %232 = vmatpush1.msra.mxu0 0.0
    %233 = vmatprep.subr.mxu0 0.0
    %234 = vmatpush1.msra.mxu0 0.0
    %235 = vmatprep.subr.mxu0 0.0
    %236 = vmatpush1.msra.mxu0 0.0
    %237 = vmatprep.subr.mxu0 0.0
    %238 = vmatpush1.msra.mxu0 0.0
    %239 = vmatprep.subr.mxu0 0.0
    %240 = vmatpush1.msra.mxu0 0.0
    %241 = vmatprep.subr.mxu0 0.0
    %242 = vmatpush1.msra.mxu0 0.0
    %243 = vmatprep.subr.mxu0 0.0
    %244 = vmatpush1.msra.mxu0 0.0
    %245 = vmatprep.subr.mxu0 0.0
    %246 = vmatpush1.msra.mxu0 0.0
    %247 = vmatprep.subr.mxu0 0.0
    %248 = vmatpush1.msra.mxu0 0.0
    %249 = vmatprep.subr.mxu0 0.0
    %250 = vmatpush1.msra.mxu0 0.0
    %251 = vmatprep.subr.mxu0 0.0
    %252 = vmatpush1.msra.mxu0 0.0
    %253 = vmatprep.subr.mxu0 0.0
    %254 = vmatpush1.msra.mxu0 0.0
    %255 = vmatprep.subr.mxu0 0.0
    %256 = vmatpush1.msra.mxu0 0.0
    %257 = vmatprep.subr.mxu0 0.0
    %258 = vmatpush1.msra.mxu0 0.0
    %259 = vmatprep.subr.mxu0 0.0
    %260 = vmatpush1.msra.mxu0 0.0
    %261 = vmatprep.subr.mxu0 0.0
    %262 = vmatpush1.msra.mxu0 0.0
    %263 = vmatprep.mubr.f32.mxu0 0.0
    %264 = vmatmul.mubr.f32.gmra.mrb[0].mxu0 %v41
    %v265 = vpop.f32.mrb[0].mxu0
    %v266 = vadd.f32 %v119, %v265
    %v267 = vpop.f32.mrb[0].mxu0
    %v268 = vadd.f32 %v123, %v267
    %269 = vdwg.mxu0
    %v274 = vcombine.low %v195, %v197
    %v275 = vcombine.low %v266, %v268
    %v277 = vunpack.c.l.s4 1983009808
    %v278 = vunpack.c.0.s8 %v277
    %v279 = vlaneseq
    %v280 = vshrl.u32 %v279, 7
    %v281 = vsub.s32 %v278, %v280
    %v282 = vrot.slane %v274, %v281
    %v284 = vunpack.c.l.s4 1983009808
    %v285 = vunpack.c.0.s8 %v284
    %v286 = vlaneseq
    %v287 = vshrl.u32 %v286, 7
    %v288 = vsub.s32 %v285, %v287
    %v289 = vrot.slane %v275, %v288
    %v290 = vcombine.low %v282, %v289
    %292 = vst [vmem:[#allocation7] sm:$0xff] %v290
    // Predicated region
    $region22: #{tpu_custom_call.1} parent=1 // pred_check
      _
    $region23: #{tpu_custom_call.1} parent=1 // pred_check_branch
      %294 = sbr.rel (0) target = $region25
    $region24: #{tpu_custom_call.1} parent=1 // pred_region
      %s296 = ssub.s32 128, 128
      %297 = vsyncadd [#allocation4], %s296
      %s299 = sshll.u32 [#allocation7], 4
      %s300 = int_to_ptr.vmem [resolvable:$true] %s299
      %302 = dma.vmem_to_hbm [thread:$0]  %s300, 128, %s3, [#allocation4]
    $region25: #{tpu_custom_call.1} parent=1 // pred_fallthru
      _
    // Predicated region
    $region26: #{tpu_custom_call.1} parent=1 // pred_check
      _
    $region27: #{tpu_custom_call.1} parent=1 // pred_check_branch
      %304 = sbr.rel (0) target = $region29
    $region28: #{tpu_custom_call.1} parent=1 // pred_region
      %305 = dma.done [#allocation4], 128
    $region29: #{tpu_custom_call.1} parent=1 // pred_fallthru
      _
    %306 = vsyncpa [#allocation3], 1
    %307 = vsyncpa [#allocation6], 1
    %308 = vsyncpa [#allocation4], 1

</llo_original>
